<compile_context>
chip_gen: v7x
topology: tpu7x:2x2x1
jax: 0.10.0
libtpu: 0.0.40
codegen_flags: <defaults>
</compile_context>

<pallas_src>
import jax
import jax.numpy as jnp
from jax import lax
from jax.experimental import pallas as pl
from jax.experimental.pallas import tpu as pltpu

_MIB = 1024 * 1024


def _vmem_capacity_bytes():
    """Physical VMEM of the local TPU (fallback: 64 MiB, the v7x minimum)."""
    try:
        return int(pltpu.get_tpu_info().vmem_capacity_bytes)
    except Exception:
        return 64 * _MIB


def _round_up(x, m):
    return -(-x // m) * m


def _pick_tile(K, per_col_bytes, fixed_bytes, budget_bytes):
    """Largest queue-tile width (multiple of 128 dividing K) within the budget."""
    tk_cap = max((budget_bytes - fixed_bytes) // max(per_col_bytes, 1), 128)
    # Keep tiles <= 8192 so large queues still produce >= 2 grid steps
    # (lets the "parallel" axis shard the HBM stream across both v7x TCs).
    tk_cap = min(tk_cap, 8192)
    if K <= tk_cap:
        return K                      # one tile covers the whole queue
    tk = (tk_cap // 128) * 128
    while tk >= 128 and K % tk != 0:  # K is padded to a multiple of 128, so
        tk -= 128                     # this always terminates with a divisor
    return max(tk, 128)


def _moco_lneg_kernel(q_ref, queue_ref, lneg_ref):
    """(N, C) x (tk, C) -> (N, tk): contract the shared C axis on the MXU with
    an f32 accumulate; one lane-dense output tile per grid step (unmasked vst)."""
    lneg_ref[...] = lax.dot_general(
        q_ref[...], queue_ref[...],
        dimension_numbers=(((1,), (1,)), ((), ())),
        preferred_element_type=jnp.float32,
    ).astype(lneg_ref.dtype)


def moco_lneg(q_scaled, queue_kc):
    """Negative logits: q_scaled (N, C) against a row-major (K, C) queue."""
    N, C = q_scaled.shape
    K, C2 = queue_kc.shape
    assert C == C2

    in_itemsize = jnp.dtype(queue_kc.dtype).itemsize
    q_itemsize = jnp.dtype(q_scaled.dtype).itemsize

    # Pad the batch to a multiple of 16 rows (bf16 LHS minimum sublane tile) and
    # the queue length to a multiple of 128 lanes; padded rows/cols sliced off.
    N_pad = max(_round_up(N, 16), 16)
    if N_pad != N:
        q_scaled = jnp.pad(q_scaled, ((0, N_pad - N), (0, 0)))
    K_pad = _round_up(K, 128)
    if K_pad != K:
        queue_kc = jnp.pad(queue_kc, ((0, K_pad - K), (0, 0)))

    # Emit bf16 negatives at large batch (the f32 writeback would otherwise
    # dominate the bf16 queue read); keep f32 at small N.
    out_dtype = jnp.bfloat16 if N_pad >= 128 else jnp.float32
    out_itemsize = jnp.dtype(out_dtype).itemsize

    # Size tiles from the VMEM budget: per-grid-step overhead and DMA size
    # dominate (the per-tile matmul is nanoseconds), so take the biggest tile
    # that fits comfortably.
    phys_vmem = _vmem_capacity_bytes()
    budget = min(phys_vmem - 16 * _MIB, 32 * _MIB)
    per_col = 2 * C * in_itemsize + 2 * N_pad * out_itemsize
    fixed = 2 * N_pad * C * q_itemsize + 2 * _MIB
    tk = _pick_tile(K_pad, per_col, fixed, budget)
    num_tiles = K_pad // tk

    # Triple-buffer the queue stream when there are enough tiles to pipeline
    # (keeps queue-tile DMAs issued back-to-back; matters most on v5e).
    n_queue_bufs = 3 if num_tiles >= 3 else 2
    queue_spec_kwargs = {}
    if n_queue_bufs == 3:
        queue_spec_kwargs["pipeline_mode"] = pl.Buffered(3)
    queue_spec = pl.BlockSpec((tk, C), lambda j: (j, 0), **queue_spec_kwargs)

    vmem_needed = (
        n_queue_bufs * tk * C * in_itemsize   # streamed queue tiles
        + 2 * N_pad * tk * out_itemsize       # double-buffered output tiles
        + 2 * N_pad * C * q_itemsize          # resident q
        + 2 * _MIB                            # headroom
    )
    # Never request more than the physical VMEM of this chip (v7x: 64 MiB).
    vmem_limit = int(min(max(vmem_needed, 16 * _MIB), phys_vmem - 8 * _MIB))

    l_neg = pl.pallas_call(
        _moco_lneg_kernel,
        out_shape=jax.ShapeDtypeStruct((N_pad, K_pad), out_dtype),
        grid_spec=pltpu.PrefetchScalarGridSpec(
            num_scalar_prefetch=0,
            grid=(num_tiles,),
            in_specs=[
                pl.BlockSpec((N_pad, C), lambda j: (0, 0)),  # q, resident in VMEM
                queue_spec,                                  # contiguous (tk, C) tile
            ],
            out_specs=pl.BlockSpec((N_pad, tk), lambda j: (0, j)),
        ),
        compiler_params=pltpu.CompilerParams(
            dimension_semantics=("parallel",),  # independent tiles -> megacore on v7x
            vmem_limit_bytes=vmem_limit,
        ),
    )(q_scaled, queue_kc)

    if N_pad != N or K_pad != K:
        l_neg = l_neg[:N, :K]
    return l_neg


def moco_forward(q, k, queue_kc, queue_ptr, tau=0.07, *, return_split=False):
    """Functional equivalent of MoCoMemoryLoss.forward.

    The queue is stored transposed relative to the PyTorch buffer: (K, C)
    row-major, so queue-tile DMAs are contiguous and the enqueue writes N
    contiguous rows.  Returns (logits, labels, new_queue, new_queue_ptr); the
    caller should donate `queue_kc` to jit so the enqueue is in place.
    """
    N, C = q.shape
    K = queue_kc.shape[0]
    assert K % N == 0  # mirrors the PyTorch assert in _dequeue_and_enqueue

    inv_tau = 1.0 / tau  # works for a Python float or a traced scalar

    # Positive logits: tiny (N, C) VPU reduce kept in full f32 in plain JAX.
    # NOTE: column 0 is f32-exact while l_neg goes through bf16 q/queue.
    l_pos = jnp.sum(q * k, axis=1, keepdims=True) * inv_tau

    # Negative logits: fold 1/tau into q (fused with the bf16 cast), stream queue.
    q_scaled = (q * inv_tau).astype(queue_kc.dtype)
    l_neg = moco_lneg(q_scaled, queue_kc)

    labels = jnp.zeros((N,), dtype=jnp.int32)

    # _dequeue_and_enqueue: with the (K, C) layout this writes N contiguous
    # rows; in place when queue_kc is donated at the jit boundary.
    ptr = queue_ptr[0]
    zero = jnp.zeros((), dtype=ptr.dtype)
    new_queue = lax.dynamic_update_slice(queue_kc, k.astype(queue_kc.dtype), (ptr, zero))
    new_ptr = queue_ptr.at[0].set(((ptr + N) % K).astype(queue_ptr.dtype))

    if return_split:
        # A fused downstream cross-entropy can consume (l_pos, l_neg) directly
        # and skip the full (N, 1+K) logits re-write.
        return (l_pos, l_neg), labels, new_queue, new_ptr

    # Module-equivalent API: logits = [l_pos | l_neg], shape (N, 1 + K).
    # TODO(synk): at real MoCo scale prefer return_split=True + a fused CE so the
    # (N, K) negatives are not re-read/re-written by this concatenate.
    logits = jnp.concatenate([l_pos, l_neg.astype(l_pos.dtype)], axis=1)

    # TODO(synk): the reference passes `criterion=nn.CrossEntropyLoss` (the class,
    # never instantiated), discards `loss`, and only returns (logits, labels),
    # so no loss is computed here either.
    return logits, labels, new_queue, new_ptr


if __name__ == "__main__":
    key = jax.random.PRNGKey(0)
    dim, queue_sz, batch = 128, 2048, 8
    tau = 0.07

    kq, kk, kqueue = jax.random.split(key, 3)
    q = jax.random.normal(kq, (batch, dim), dtype=jnp.float32)
    k = jax.random.normal(kk, (batch, dim), dtype=jnp.float32)
    q = q / jnp.linalg.norm(q, axis=1, keepdims=True)
    k = k / jnp.linalg.norm(k, axis=1, keepdims=True)

    # PyTorch buffer: randn(dim, queue_sz) normalized along dim=0; here stored
    # transposed (queue_sz, dim) row-major and in bf16 (halves HBM streaming).
    queue_ck = jax.random.normal(kqueue, (dim, queue_sz), dtype=jnp.float32)
    queue_ck = queue_ck / jnp.linalg.norm(queue_ck, axis=0, keepdims=True)
    queue_kc = queue_ck.T.astype(jnp.bfloat16)
    queue_ptr = jnp.zeros((1,), dtype=jnp.int32)

    # Pure-JAX reference, computed BEFORE the jitted call because the queue
    # buffer is donated (in-place enqueue) and is invalid afterwards.
    ref_logits = jnp.concatenate(
        [jnp.sum(q * k, axis=1, keepdims=True),
         q @ queue_kc.astype(jnp.float32).T],
        axis=1,
    ) / tau
    ref_rows = k.astype(jnp.bfloat16)
    jax.block_until_ready((ref_logits, ref_rows))

    fwd = jax.jit(moco_forward, donate_argnums=(2,))  # donate the queue buffer
    logits, labels, new_queue, new_ptr = fwd(q, k, queue_kc, queue_ptr, tau)
    jax.block_until_ready((logits, labels, new_queue, new_ptr))

    assert logits.shape == (batch, 1 + queue_sz) and logits.dtype == jnp.float32
    assert labels.shape == (batch,) and labels.dtype == jnp.int32
    # bf16 streaming of q/queue -> loosened tolerance vs the f32 reference.
    assert jnp.allclose(logits, ref_logits, atol=0.1, rtol=0.02)
    assert jnp.array_equal(new_queue[:batch, :], ref_rows)
    assert int(new_ptr[0]) == batch % queue_sz

    print("KERNEL_OK")
</pallas_src>

<mosaic_0001>
module attributes {stable_mosaic.version = 11 : i64} {
  func.func @_moco_lneg_kernel(%arg0: i32, %arg1: memref<16x128xbf16, #tpu.memory_space<vmem>>, %arg2: memref<2048x128xbf16, #tpu.memory_space<vmem>>, %arg3: memref<16x2048xf32, #tpu.memory_space<vmem>>) attributes {dimension_semantics = [#tpu.dimension_semantics<parallel>], iteration_bounds = array<i64: 1>, scalar_prefetch = 0 : i64, scratch_operands = 0 : i64, tpu.core_type = #tpu.core_type<tc>, window_params = [{pipeline_mode = #tpu.pipeline_mode<synchronous>, transform_indices = @transform_0, window_bounds = array<i64: 16, 128>}, {transform_indices = @transform_1, window_bounds = array<i64: 2048, 128>}, {transform_indices = @transform_2, window_bounds = array<i64: 16, 2048>}]} {
    %c0 = arith.constant 0 : index
    %c0_0 = arith.constant 0 : index
    %0 = vector.load %arg1[%c0, %c0_0] : memref<16x128xbf16, #tpu.memory_space<vmem>>, vector<16x128xbf16>
    %c0_1 = arith.constant 0 : index
    %c0_2 = arith.constant 0 : index
    %1 = vector.load %arg2[%c0_1, %c0_2] : memref<2048x128xbf16, #tpu.memory_space<vmem>>, vector<2048x128xbf16>
    %cst = arith.constant dense<0.000000e+00> : vector<16x2048xf32>
    %2 = tpu.matmul %0, %1, %cst {dimension_numbers = #tpu.dot_dimension_numbers<[1], [1], [0], [0], [0, 0, 1, 0], [], []>} : vector<16x128xbf16>, vector<2048x128xbf16>, vector<16x2048xf32> -> vector<16x2048xf32>
    %c0_3 = arith.constant 0 : index
    %c0_4 = arith.constant 0 : index
    %3 = vector.load %arg3[%c0_3, %c0_4] : memref<16x2048xf32, #tpu.memory_space<vmem>>, vector<16x2048xf32>
    tpu.vector_store %arg3[%c0_3, %c0_4], %2 {strides = array<i32>} : memref<16x2048xf32, #tpu.memory_space<vmem>>, vector<16x2048xf32>,
    return
  }
  func.func @transform_0(%arg0: i32) -> (i32, i32) {
    %c0_i32 = arith.constant 0 : i32
    %c0_i32_0 = arith.constant 0 : i32
    %c0_i32_1 = arith.constant 0 : i32
    return %c0_i32, %c0_i32_0 : i32, i32
  }
  func.func @transform_1(%arg0: i32) -> (i32, i32) {
    %c0_i32 = arith.constant 0 : i32
    %c0_i32_0 = arith.constant 0 : i32
    return %arg0, %c0_i32 : i32, i32
  }
  func.func @transform_2(%arg0: i32) -> (i32, i32) {
    %c0_i32 = arith.constant 0 : i32
    %c0_i32_0 = arith.constant 0 : i32
    return %c0_i32, %arg0 : i32, i32
  }
}

</mosaic_0001>

<llo_original>
// kernel: moco_forward.1
$region0: #{moco_forward.1}
  #allocation0 [shape = 'u32[]', space=smem, size = 0x4, offset = 0x4, fixed_abs, tag = 'smem constant byte address 0x4 - core index']
  #allocation1 [shape = 'u32[144,128]{1,0:T(1,128)}', space=vmem, size = 0x12000, scoped, tag = 'internal scratch']
  %s0 = inlined_call_operand.vmem [shape: bf16[16,128], index: 0, kind: input, shape index: {}]
  %s1 = inlined_call_operand.hbm [shape: bf16[2048,128], index: 1, kind: input, shape index: {}]
  %s2 = inlined_call_operand.vmem [shape: f32[16,2048], index: 2, kind: output, shape index: {}]
  %s3 = sld [smem:[#allocation0]]
  $region22: #{moco_forward.1} parent=0
    _
  %s5 = ssub.s32 1, %s3
  %s6 = scalar_select 0, %s5, %s3
  $region1: #{moco_forward.1} parent=0
    #allocation2 [shape = 'u8[524288]{0}', space=vmem, size = 0x80000, scoped, tag = 'input window, operand 1, single buffered']
    #allocation3 [shape = 's32[1]{0}', space=sflag, size = 0x4, scoped, tag = 'scoped memory for moco_forward.1']
    %7 = vsyncpa [#allocation3], 0
    // Predicated region
    $region2: #{moco_forward.1} parent=1 // pred_check
      _
    $region3: #{moco_forward.1} parent=1 // pred_check_branch
      %9 = sbr.rel (0) target = $region5
    $region4: #{moco_forward.1} parent=1 // pred_region
      _
    $region5: #{moco_forward.1} parent=1 // pred_fallthru
      _
    // Predicated region
    $region6: #{moco_forward.1} parent=1 // pred_check
      _
    $region7: #{moco_forward.1} parent=1 // pred_check_branch
      %11 = sbr.rel (0) target = $region9
    $region8: #{moco_forward.1} parent=1 // pred_region
      %s13 = ssub.s32 16384, 16384
      %14 = vsyncadd [#allocation3], %s13
      %s15 = sshll.u32 [#allocation2], 4
      %s16 = int_to_ptr.vmem [resolvable:$true] %s15
      %21 = dma.hbm_to_vmem [thread:$0]  %s1, 16384, %s16, [#allocation3], 64, 64, 4
    $region9: #{moco_forward.1} parent=1 // pred_fallthru
      _
    // Predicated region
    $region10: #{moco_forward.1} parent=1 // pred_check
      _
    $region11: #{moco_forward.1} parent=1 // pred_check_branch
      %23 = sbr.rel (0) target = $region13
    $region12: #{moco_forward.1} parent=1 // pred_region
      %24 = dma.done [#allocation3], 16384
    $region13: #{moco_forward.1} parent=1 // pred_fallthru
      _
    %v26 = vld [vmem:[%s0] sm:$0xf]
    %v27 = vld [vmem:[%s0 + $0x4] sm:$0xf]
    %v28 = vld [vmem:[#allocation2] sm:$0xf]
    %v29 = vld [vmem:[#allocation2 + $0x4] sm:$0xf]
    %v30 = vld [vmem:[#allocation2 + $0x8] sm:$0xf]
    %v31 = vld [vmem:[#allocation2 + $0xc] sm:$0xf]
    %v32 = vld [vmem:[#allocation2 + $0x10] sm:$0xf]
    %v33 = vld [vmem:[#allocation2 + $0x14] sm:$0xf]
    %v34 = vld [vmem:[#allocation2 + $0x18] sm:$0xf]
    %v35 = vld [vmem:[#allocation2 + $0x1c] sm:$0xf]
    %v36 = vld [vmem:[#allocation2 + $0x20] sm:$0xf]
    %v37 = vld [vmem:[#allocation2 + $0x24] sm:$0xf]
    %v38 = vld [vmem:[#allocation2 + $0x28] sm:$0xf]
    %v39 = vld [vmem:[#allocation2 + $0x2c] sm:$0xf]
    %v40 = vld [vmem:[#allocation2 + $0x30] sm:$0xf]
    %v41 = vld [vmem:[#allocation2 + $0x34] sm:$0xf]
    %v42 = vld [vmem:[#allocation2 + $0x38] sm:$0xf]
    %v43 = vld [vmem:[#allocation2 + $0x3c] sm:$0xf]
    %v44 = vld [vmem:[#allocation2 + $0x40] sm:$0xf]
    %v45 = vld [vmem:[#allocation2 + $0x44] sm:$0xf]
    %v46 = vld [vmem:[#allocation2 + $0x48] sm:$0xf]
    %v47 = vld [vmem:[#allocation2 + $0x4c] sm:$0xf]
    %v48 = vld [vmem:[#allocation2 + $0x50] sm:$0xf]
    %v49 = vld [vmem:[#allocation2 + $0x54] sm:$0xf]
    %v50 = vld [vmem:[#allocation2 + $0x58] sm:$0xf]
    %v51 = vld [vmem:[#allocation2 + $0x5c] sm:$0xf]
    %v52 = vld [vmem:[#allocation2 + $0x60] sm:$0xf]
    %v53 = vld [vmem:[#allocation2 + $0x64] sm:$0xf]
    %v54 = vld [vmem:[#allocation2 + $0x68] sm:$0xf]
    %v55 = vld [vmem:[#allocation2 + $0x6c] sm:$0xf]
    %v56 = vld [vmem:[#allocation2 + $0x70] sm:$0xf]
    %v57 = vld [vmem:[#allocation2 + $0x74] sm:$0xf]
    %v58 = vld [vmem:[#allocation2 + $0x78] sm:$0xf]
    %v59 = vld [vmem:[#allocation2 + $0x7c] sm:$0xf]
    %v60 = vld [vmem:[#allocation2 + $0x80] sm:$0xf]
    %v61 = vld [vmem:[#allocation2 + $0x84] sm:$0xf]
    %v62 = vld [vmem:[#allocation2 + $0x88] sm:$0xf]
    %v63 = vld [vmem:[#allocation2 + $0x8c] sm:$0xf]
    %v64 = vld [vmem:[#allocation2 + $0x90] sm:$0xf]
    %v65 = vld [vmem:[#allocation2 + $0x94] sm:$0xf]
    %v66 = vld [vmem:[#allocation2 + $0x98] sm:$0xf]
    %v67 = vld [vmem:[#allocation2 + $0x9c] sm:$0xf]
    %v68 = vld [vmem:[#allocation2 + $0xa0] sm:$0xf]
    %v69 = vld [vmem:[#allocation2 + $0xa4] sm:$0xf]
    %v70 = vld [vmem:[#allocation2 + $0xa8] sm:$0xf]
    %v71 = vld [vmem:[#allocation2 + $0xac] sm:$0xf]
    %v72 = vld [vmem:[#allocation2 + $0xb0] sm:$0xf]
    %v73 = vld [vmem:[#allocation2 + $0xb4] sm:$0xf]
    %v74 = vld [vmem:[#allocation2 + $0xb8] sm:$0xf]
    %v75 = vld [vmem:[#allocation2 + $0xbc] sm:$0xf]
    %v76 = vld [vmem:[#allocation2 + $0xc0] sm:$0xf]
    %v77 = vld [vmem:[#allocation2 + $0xc4] sm:$0xf]
    %v78 = vld [vmem:[#allocation2 + $0xc8] sm:$0xf]
    %v79 = vld [vmem:[#allocation2 + $0xcc] sm:$0xf]
    %v80 = vld [vmem:[#allocation2 + $0xd0] sm:$0xf]
    %v81 = vld [vmem:[#allocation2 + $0xd4] sm:$0xf]
    %v82 = vld [vmem:[#allocation2 + $0xd8] sm:$0xf]
    %v83 = vld [vmem:[#allocation2 + $0xdc] sm:$0xf]
    %v84 = vld [vmem:[#allocation2 + $0xe0] sm:$0xf]
    %v85 = vld [vmem:[#allocation2 + $0xe4] sm:$0xf]
    %v86 = vld [vmem:[#allocation2 + $0xe8] sm:$0xf]
    %v87 = vld [vmem:[#allocation2 + $0xec] sm:$0xf]
    %v88 = vld [vmem:[#allocation2 + $0xf0] sm:$0xf]
    %v89 = vld [vmem:[#allocation2 + $0xf4] sm:$0xf]
    %v90 = vld [vmem:[#allocation2 + $0xf8] sm:$0xf]
    %v91 = vld [vmem:[#allocation2 + $0xfc] sm:$0xf]
    %v92 = vld [vmem:[#allocation2 + $0x100] sm:$0xf]
    %v93 = vld [vmem:[#allocation2 + $0x104] sm:$0xf]
    %v94 = vld [vmem:[#allocation2 + $0x108] sm:$0xf]
    %v95 = vld [vmem:[#allocation2 + $0x10c] sm:$0xf]
    %v96 = vld [vmem:[#allocation2 + $0x110] sm:$0xf]
    %v97 = vld [vmem:[#allocation2 + $0x114] sm:$0xf]
    %v98 = vld [vmem:[#allocation2 + $0x118] sm:$0xf]
    %v99 = vld [vmem:[#allocation2 + $0x11c] sm:$0xf]
    %v100 = vld [vmem:[#allocation2 + $0x120] sm:$0xf]
    %v101 = vld [vmem:[#allocation2 + $0x124] sm:$0xf]
    %v102 = vld [vmem:[#allocation2 + $0x128] sm:$0xf]
    %v103 = vld [vmem:[#allocation2 + $0x12c] sm:$0xf]
    %v104 = vld [vmem:[#allocation2 + $0x130] sm:$0xf]
    %v105 = vld [vmem:[#allocation2 + $0x134] sm:$0xf]
    %v106 = vld [vmem:[#allocation2 + $0x138] sm:$0xf]
    %v107 = vld [vmem:[#allocation2 + $0x13c] sm:$0xf]
    %v108 = vld [vmem:[#allocation2 + $0x140] sm:$0xf]
    %v109 = vld [vmem:[#allocation2 + $0x144] sm:$0xf]
    %v110 = vld [vmem:[#allocation2 + $0x148] sm:$0xf]
    %v111 = vld [vmem:[#allocation2 + $0x14c] sm:$0xf]
    %v112 = vld [vmem:[#allocation2 + $0x150] sm:$0xf]
    %v113 = vld [vmem:[#allocation2 + $0x154] sm:$0xf]
    %v114 = vld [vmem:[#allocation2 + $0x158] sm:$0xf]
    %v115 = vld [vmem:[#allocation2 + $0x15c] sm:$0xf]
    %v116 = vld [vmem:[#allocation2 + $0x160] sm:$0xf]
    %v117 = vld [vmem:[#allocation2 + $0x164] sm:$0xf]
    %v118 = vld [vmem:[#allocation2 + $0x168] sm:$0xf]
    %v119 = vld [vmem:[#allocation2 + $0x16c] sm:$0xf]
    %v120 = vld [vmem:[#allocation2 + $0x170] sm:$0xf]
    %v121 = vld [vmem:[#allocation2 + $0x174] sm:$0xf]
    %v122 = vld [vmem:[#allocation2 + $0x178] sm:$0xf]
    %v123 = vld [vmem:[#allocation2 + $0x17c] sm:$0xf]
    %v124 = vld [vmem:[#allocation2 + $0x180] sm:$0xf]
    %v125 = vld [vmem:[#allocation2 + $0x184] sm:$0xf]
    %v126 = vld [vmem:[#allocation2 + $0x188] sm:$0xf]
    %v127 = vld [vmem:[#allocation2 + $0x18c] sm:$0xf]
    %v128 = vld [vmem:[#allocation2 + $0x190] sm:$0xf]
    %v129 = vld [vmem:[#allocation2 + $0x194] sm:$0xf]
    %v130 = vld [vmem:[#allocation2 + $0x198] sm:$0xf]
    %v131 = vld [vmem:[#allocation2 + $0x19c] sm:$0xf]
    %v132 = vld [vmem:[#allocation2 + $0x1a0] sm:$0xf]
    %v133 = vld [vmem:[#allocation2 + $0x1a4] sm:$0xf]
    %v134 = vld [vmem:[#allocation2 + $0x1a8] sm:$0xf]
    %v135 = vld [vmem:[#allocation2 + $0x1ac] sm:$0xf]
    %v136 = vld [vmem:[#allocation2 + $0x1b0] sm:$0xf]
    %v137 = vld [vmem:[#allocation2 + $0x1b4] sm:$0xf]
    %v138 = vld [vmem:[#allocation2 + $0x1b8] sm:$0xf]
    %v139 = vld [vmem:[#allocation2 + $0x1bc] sm:$0xf]
    %v140 = vld [vmem:[#allocation2 + $0x1c0] sm:$0xf]
    %v141 = vld [vmem:[#allocation2 + $0x1c4] sm:$0xf]
    %v142 = vld [vmem:[#allocation2 + $0x1c8] sm:$0xf]
    %v143 = vld [vmem:[#allocation2 + $0x1cc] sm:$0xf]
    %v144 = vld [vmem:[#allocation2 + $0x1d0] sm:$0xf]
    %v145 = vld [vmem:[#allocation2 + $0x1d4] sm:$0xf]
    %v146 = vld [vmem:[#allocation2 + $0x1d8] sm:$0xf]
    %v147 = vld [vmem:[#allocation2 + $0x1dc] sm:$0xf]
    %v148 = vld [vmem:[#allocation2 + $0x1e0] sm:$0xf]
    %v149 = vld [vmem:[#allocation2 + $0x1e4] sm:$0xf]
    %v150 = vld [vmem:[#allocation2 + $0x1e8] sm:$0xf]
    %v151 = vld [vmem:[#allocation2 + $0x1ec] sm:$0xf]
    %v152 = vld [vmem:[#allocation2 + $0x1f0] sm:$0xf]
    %v153 = vld [vmem:[#allocation2 + $0x1f4] sm:$0xf]
    %v154 = vld [vmem:[#allocation2 + $0x1f8] sm:$0xf]
    %v155 = vld [vmem:[#allocation2 + $0x1fc] sm:$0xf]
    %v156 = vld [vmem:[#allocation2 + $0x200] sm:$0xf]
    %v157 = vld [vmem:[#allocation2 + $0x204] sm:$0xf]
    %v158 = vld [vmem:[#allocation2 + $0x208] sm:$0xf]
    %v159 = vld [vmem:[#allocation2 + $0x20c] sm:$0xf]
    %v160 = vld [vmem:[#allocation2 + $0x210] sm:$0xf]
    %v161 = vld [vmem:[#allocation2 + $0x214] sm:$0xf]
    %v162 = vld [vmem:[#allocation2 + $0x218] sm:$0xf]
    %v163 = vld [vmem:[#allocation2 + $0x21c] sm:$0xf]
    %v164 = vld [vmem:[#allocation2 + $0x220] sm:$0xf]
    %v165 = vld [vmem:[#allocation2 + $0x224] sm:$0xf]
    %v166 = vld [vmem:[#allocation2 + $0x228] sm:$0xf]
    %v167 = vld [vmem:[#allocation2 + $0x22c] sm:$0xf]
    %v168 = vld [vmem:[#allocation2 + $0x230] sm:$0xf]
    %v169 = vld [vmem:[#allocation2 + $0x234] sm:$0xf]
    %v170 = vld [vmem:[#allocation2 + $0x238] sm:$0xf]
    %v171 = vld [vmem:[#allocation2 + $0x23c] sm:$0xf]
    %v172 = vld [vmem:[#allocation2 + $0x240] sm:$0xf]
    %v173 = vld [vmem:[#allocation2 + $0x244] sm:$0xf]
    %v174 = vld [vmem:[#allocation2 + $0x248] sm:$0xf]
    %v175 = vld [vmem:[#allocation2 + $0x24c] sm:$0xf]
    %v176 = vld [vmem:[#allocation2 + $0x250] sm:$0xf]
    %v177 = vld [vmem:[#allocation2 + $0x254] sm:$0xf]
    %v178 = vld [vmem:[#allocation2 + $0x258] sm:$0xf]
    %v179 = vld [vmem:[#allocation2 + $0x25c] sm:$0xf]
    %v180 = vld [vmem:[#allocation2 + $0x260] sm:$0xf]
    %v181 = vld [vmem:[#allocation2 + $0x264] sm:$0xf]
    %v182 = vld [vmem:[#allocation2 + $0x268] sm:$0xf]
    %v183 = vld [vmem:[#allocation2 + $0x26c] sm:$0xf]
    %v184 = vld [vmem:[#allocation2 + $0x270] sm:$0xf]
    %v185 = vld [vmem:[#allocation2 + $0x274] sm:$0xf]
    %v186 = vld [vmem:[#allocation2 + $0x278] sm:$0xf]
    %v187 = vld [vmem:[#allocation2 + $0x27c] sm:$0xf]
    %v188 = vld [vmem:[#allocation2 + $0x280] sm:$0xf]
    %v189 = vld [vmem:[#allocation2 + $0x284] sm:$0xf]
    %v190 = vld [vmem:[#allocation2 + $0x288] sm:$0xf]
    %v191 = vld [vmem:[#allocation2 + $0x28c] sm:$0xf]
    %v192 = vld [vmem:[#allocation2 + $0x290] sm:$0xf]
    %v193 = vld [vmem:[#allocation2 + $0x294] sm:$0xf]
    %v194 = vld [vmem:[#allocation2 + $0x298] sm:$0xf]
    %v195 = vld [vmem:[#allocation2 + $0x29c] sm:$0xf]
    %v196 = vld [vmem:[#allocation2 + $0x2a0] sm:$0xf]
    %v197 = vld [vmem:[#allocation2 + $0x2a4] sm:$0xf]
    %v198 = vld [vmem:[#allocation2 + $0x2a8] sm:$0xf]
    %v199 = vld [vmem:[#allocation2 + $0x2ac] sm:$0xf]
    %v200 = vld [vmem:[#allocation2 + $0x2b0] sm:$0xf]
    %v201 = vld [vmem:[#allocation2 + $0x2b4] sm:$0xf]
    %v202 = vld [vmem:[#allocation2 + $0x2b8] sm:$0xf]
    %v203 = vld [vmem:[#allocation2 + $0x2bc] sm:$0xf]
    %v204 = vld [vmem:[#allocation2 + $0x2c0] sm:$0xf]
    %v205 = vld [vmem:[#allocation2 + $0x2c4] sm:$0xf]
    %v206 = vld [vmem:[#allocation2 + $0x2c8] sm:$0xf]
    %v207 = vld [vmem:[#allocation2 + $0x2cc] sm:$0xf]
    %v208 = vld [vmem:[#allocation2 + $0x2d0] sm:$0xf]
    %v209 = vld [vmem:[#allocation2 + $0x2d4] sm:$0xf]
    %v210 = vld [vmem:[#allocation2 + $0x2d8] sm:$0xf]
    %v211 = vld [vmem:[#allocation2 + $0x2dc] sm:$0xf]
    %v212 = vld [vmem:[#allocation2 + $0x2e0] sm:$0xf]
    %v213 = vld [vmem:[#allocation2 + $0x2e4] sm:$0xf]
    %v214 = vld [vmem:[#allocation2 + $0x2e8] sm:$0xf]
    %v215 = vld [vmem:[#allocation2 + $0x2ec] sm:$0xf]
    %v216 = vld [vmem:[#allocation2 + $0x2f0] sm:$0xf]
    %v217 = vld [vmem:[#allocation2 + $0x2f4] sm:$0xf]
    %v218 = vld [vmem:[#allocation2 + $0x2f8] sm:$0xf]
    %v219 = vld [vmem:[#allocation2 + $0x2fc] sm:$0xf]
    %v220 = vld [vmem:[#allocation2 + $0x300] sm:$0xf]
    %v221 = vld [vmem:[#allocation2 + $0x304] sm:$0xf]
    %v222 = vld [vmem:[#allocation2 + $0x308] sm:$0xf]
    %v223 = vld [vmem:[#allocation2 + $0x30c] sm:$0xf]
    %v224 = vld [vmem:[#allocation2 + $0x310] sm:$0xf]
    %v225 = vld [vmem:[#allocation2 + $0x314] sm:$0xf]
    %v226 = vld [vmem:[#allocation2 + $0x318] sm:$0xf]
    %v227 = vld [vmem:[#allocation2 + $0x31c] sm:$0xf]
    %v228 = vld [vmem:[#allocation2 + $0x320] sm:$0xf]
    %v229 = vld [vmem:[#allocation2 + $0x324] sm:$0xf]
    %v230 = vld [vmem:[#allocation2 + $0x328] sm:$0xf]
    %v231 = vld [vmem:[#allocation2 + $0x32c] sm:$0xf]
    %v232 = vld [vmem:[#allocation2 + $0x330] sm:$0xf]
    %v233 = vld [vmem:[#allocation2 + $0x334] sm:$0xf]
    %v234 = vld [vmem:[#allocation2 + $0x338] sm:$0xf]
    %v235 = vld [vmem:[#allocation2 + $0x33c] sm:$0xf]
    %v236 = vld [vmem:[#allocation2 + $0x340] sm:$0xf]
    %v237 = vld [vmem:[#allocation2 + $0x344] sm:$0xf]
    %v238 = vld [vmem:[#allocation2 + $0x348] sm:$0xf]
    %v239 = vld [vmem:[#allocation2 + $0x34c] sm:$0xf]
    %v240 = vld [vmem:[#allocation2 + $0x350] sm:$0xf]
    %v241 = vld [vmem:[#allocation2 + $0x354] sm:$0xf]
    %v242 = vld [vmem:[#allocation2 + $0x358] sm:$0xf]
    %v243 = vld [vmem:[#allocation2 + $0x35c] sm:$0xf]
    %v244 = vld [vmem:[#allocation2 + $0x360] sm:$0xf]
    %v245 = vld [vmem:[#allocation2 + $0x364] sm:$0xf]
    %v246 = vld [vmem:[#allocation2 + $0x368] sm:$0xf]
    %v247 = vld [vmem:[#allocation2 + $0x36c] sm:$0xf]
    %v248 = vld [vmem:[#allocation2 + $0x370] sm:$0xf]
    %v249 = vld [vmem:[#allocation2 + $0x374] sm:$0xf]
    %v250 = vld [vmem:[#allocation2 + $0x378] sm:$0xf]
    %v251 = vld [vmem:[#allocation2 + $0x37c] sm:$0xf]
    %v252 = vld [vmem:[#allocation2 + $0x380] sm:$0xf]
    %v253 = vld [vmem:[#allocation2 + $0x384] sm:$0xf]
    %v254 = vld [vmem:[#allocation2 + $0x388] sm:$0xf]
    %v255 = vld [vmem:[#allocation2 + $0x38c] sm:$0xf]
    %v256 = vld [vmem:[#allocation2 + $0x390] sm:$0xf]
    %v257 = vld [vmem:[#allocation2 + $0x394] sm:$0xf]
    %v258 = vld [vmem:[#allocation2 + $0x398] sm:$0xf]
    %v259 = vld [vmem:[#allocation2 + $0x39c] sm:$0xf]
    %v260 = vld [vmem:[#allocation2 + $0x3a0] sm:$0xf]
    %v261 = vld [vmem:[#allocation2 + $0x3a4] sm:$0xf]
    %v262 = vld [vmem:[#allocation2 + $0x3a8] sm:$0xf]
    %v263 = vld [vmem:[#allocation2 + $0x3ac] sm:$0xf]
    %v264 = vld [vmem:[#allocation2 + $0x3b0] sm:$0xf]
    %v265 = vld [vmem:[#allocation2 + $0x3b4] sm:$0xf]
    %v266 = vld [vmem:[#allocation2 + $0x3b8] sm:$0xf]
    %v267 = vld [vmem:[#allocation2 + $0x3bc] sm:$0xf]
    %v268 = vld [vmem:[#allocation2 + $0x3c0] sm:$0xf]
    %v269 = vld [vmem:[#allocation2 + $0x3c4] sm:$0xf]
    %v270 = vld [vmem:[#allocation2 + $0x3c8] sm:$0xf]
    %v271 = vld [vmem:[#allocation2 + $0x3cc] sm:$0xf]
    %v272 = vld [vmem:[#allocation2 + $0x3d0] sm:$0xf]
    %v273 = vld [vmem:[#allocation2 + $0x3d4] sm:$0xf]
    %v274 = vld [vmem:[#allocation2 + $0x3d8] sm:$0xf]
    %v275 = vld [vmem:[#allocation2 + $0x3dc] sm:$0xf]
    %v276 = vld [vmem:[#allocation2 + $0x3e0] sm:$0xf]
    %v277 = vld [vmem:[#allocation2 + $0x3e4] sm:$0xf]
    %v278 = vld [vmem:[#allocation2 + $0x3e8] sm:$0xf]
    %v279 = vld [vmem:[#allocation2 + $0x3ec] sm:$0xf]
    %v280 = vld [vmem:[#allocation2 + $0x3f0] sm:$0xf]
    %v281 = vld [vmem:[#allocation2 + $0x3f4] sm:$0xf]
    %v282 = vld [vmem:[#allocation2 + $0x3f8] sm:$0xf]
    %v283 = vld [vmem:[#allocation2 + $0x3fc] sm:$0xf]
    %v286 = vunpack.c.l.b16 %v26
    %v287 = vunpack.c.l.b16 %v27
    %v288 = vpack.c.b16 %v287, %v286
    %v546 = vunpack.c.l.b16 %v28
    %v547 = vunpack.c.l.b16 %v29
    %v548 = vunpack.c.l.b16 %v30
    %v549 = vunpack.c.l.b16 %v31
    %v550 = vunpack.c.l.b16 %v32
    %v551 = vunpack.c.l.b16 %v33
    %v552 = vunpack.c.l.b16 %v34
    %v553 = vunpack.c.l.b16 %v35
    %v554 = vunpack.c.l.b16 %v36
    %v555 = vunpack.c.l.b16 %v37
    %v556 = vunpack.c.l.b16 %v38
    %v557 = vunpack.c.l.b16 %v39
    %v558 = vunpack.c.l.b16 %v40
    %v559 = vunpack.c.l.b16 %v41
    %v560 = vunpack.c.l.b16 %v42
    %v561 = vunpack.c.l.b16 %v43
    %v562 = vunpack.c.l.b16 %v44
    %v563 = vunpack.c.l.b16 %v45
    %v564 = vunpack.c.l.b16 %v46
    %v565 = vunpack.c.l.b16 %v47
    %v566 = vunpack.c.l.b16 %v48
    %v567 = vunpack.c.l.b16 %v49
    %v568 = vunpack.c.l.b16 %v50
    %v569 = vunpack.c.l.b16 %v51
    %v570 = vunpack.c.l.b16 %v52
    %v571 = vunpack.c.l.b16 %v53
    %v572 = vunpack.c.l.b16 %v54
    %v573 = vunpack.c.l.b16 %v55
    %v574 = vunpack.c.l.b16 %v56
    %v575 = vunpack.c.l.b16 %v57
    %v576 = vunpack.c.l.b16 %v58
    %v577 = vunpack.c.l.b16 %v59
    %v578 = vunpack.c.l.b16 %v60
    %v579 = vunpack.c.l.b16 %v61
    %v580 = vunpack.c.l.b16 %v62
    %v581 = vunpack.c.l.b16 %v63
    %v582 = vunpack.c.l.b16 %v64
    %v583 = vunpack.c.l.b16 %v65
    %v584 = vunpack.c.l.b16 %v66
    %v585 = vunpack.c.l.b16 %v67
    %v586 = vunpack.c.l.b16 %v68
    %v587 = vunpack.c.l.b16 %v69
    %v588 = vunpack.c.l.b16 %v70
    %v589 = vunpack.c.l.b16 %v71
    %v590 = vunpack.c.l.b16 %v72
    %v591 = vunpack.c.l.b16 %v73
    %v592 = vunpack.c.l.b16 %v74
    %v593 = vunpack.c.l.b16 %v75
    %v594 = vunpack.c.l.b16 %v76
    %v595 = vunpack.c.l.b16 %v77
    %v596 = vunpack.c.l.b16 %v78
    %v597 = vunpack.c.l.b16 %v79
    %v598 = vunpack.c.l.b16 %v80
    %v599 = vunpack.c.l.b16 %v81
    %v600 = vunpack.c.l.b16 %v82
    %v601 = vunpack.c.l.b16 %v83
    %v602 = vunpack.c.l.b16 %v84
    %v603 = vunpack.c.l.b16 %v85
    %v604 = vunpack.c.l.b16 %v86
    %v605 = vunpack.c.l.b16 %v87
    %v606 = vunpack.c.l.b16 %v88
    %v607 = vunpack.c.l.b16 %v89
    %v608 = vunpack.c.l.b16 %v90
    %v609 = vunpack.c.l.b16 %v91
    %v610 = vunpack.c.l.b16 %v92
    %v611 = vunpack.c.l.b16 %v93
    %v612 = vunpack.c.l.b16 %v94
    %v613 = vunpack.c.l.b16 %v95
    %v614 = vunpack.c.l.b16 %v96
    %v615 = vunpack.c.l.b16 %v97
    %v616 = vunpack.c.l.b16 %v98
    %v617 = vunpack.c.l.b16 %v99
    %v618 = vunpack.c.l.b16 %v100
    %v619 = vunpack.c.l.b16 %v101
    %v620 = vunpack.c.l.b16 %v102
    %v621 = vunpack.c.l.b16 %v103
    %v622 = vunpack.c.l.b16 %v104
    %v623 = vunpack.c.l.b16 %v105
    %v624 = vunpack.c.l.b16 %v106
    %v625 = vunpack.c.l.b16 %v107
    %v626 = vunpack.c.l.b16 %v108
    %v627 = vunpack.c.l.b16 %v109
    %v628 = vunpack.c.l.b16 %v110
    %v629 = vunpack.c.l.b16 %v111
    %v630 = vunpack.c.l.b16 %v112
    %v631 = vunpack.c.l.b16 %v113
    %v632 = vunpack.c.l.b16 %v114
    %v633 = vunpack.c.l.b16 %v115
    %v634 = vunpack.c.l.b16 %v116
    %v635 = vunpack.c.l.b16 %v117
    %v636 = vunpack.c.l.b16 %v118
    %v637 = vunpack.c.l.b16 %v119
    %v638 = vunpack.c.l.b16 %v120
    %v639 = vunpack.c.l.b16 %v121
    %v640 = vunpack.c.l.b16 %v122
    %v641 = vunpack.c.l.b16 %v123
    %v642 = vunpack.c.l.b16 %v124
    %v643 = vunpack.c.l.b16 %v125
    %v644 = vunpack.c.l.b16 %v126
    %v645 = vunpack.c.l.b16 %v127
    %v646 = vunpack.c.l.b16 %v128
    %v647 = vunpack.c.l.b16 %v129
    %v648 = vunpack.c.l.b16 %v130
    %v649 = vunpack.c.l.b16 %v131
    %v650 = vunpack.c.l.b16 %v132
    %v651 = vunpack.c.l.b16 %v133
    %v652 = vunpack.c.l.b16 %v134
    %v653 = vunpack.c.l.b16 %v135
    %v654 = vunpack.c.l.b16 %v136
    %v655 = vunpack.c.l.b16 %v137
    %v656 = vunpack.c.l.b16 %v138
    %v657 = vunpack.c.l.b16 %v139
    %v658 = vunpack.c.l.b16 %v140
    %v659 = vunpack.c.l.b16 %v141
    %v660 = vunpack.c.l.b16 %v142
    %v661 = vunpack.c.l.b16 %v143
    %v662 = vunpack.c.l.b16 %v144
    %v663 = vunpack.c.l.b16 %v145
    %v664 = vunpack.c.l.b16 %v146
    %v665 = vunpack.c.l.b16 %v147
    %v666 = vunpack.c.l.b16 %v148
    %v667 = vunpack.c.l.b16 %v149
    %v668 = vunpack.c.l.b16 %v150
    %v669 = vunpack.c.l.b16 %v151
    %v670 = vunpack.c.l.b16 %v152
    %v671 = vunpack.c.l.b16 %v153
    %v672 = vunpack.c.l.b16 %v154
    %v673 = vunpack.c.l.b16 %v155
    %v674 = vunpack.c.l.b16 %v156
    %v675 = vunpack.c.l.b16 %v157
    %v676 = vunpack.c.l.b16 %v158
    %v677 = vunpack.c.l.b16 %v159
    %v678 = vunpack.c.l.b16 %v160
    %v679 = vunpack.c.l.b16 %v161
    %v680 = vunpack.c.l.b16 %v162
    %v681 = vunpack.c.l.b16 %v163
    %v682 = vunpack.c.l.b16 %v164
    %v683 = vunpack.c.l.b16 %v165
    %v684 = vunpack.c.l.b16 %v166
    %v685 = vunpack.c.l.b16 %v167
    %v686 = vunpack.c.l.b16 %v168
    %v687 = vunpack.c.l.b16 %v169
    %v688 = vunpack.c.l.b16 %v170
    %v689 = vunpack.c.l.b16 %v171
    %v690 = vunpack.c.l.b16 %v172
    %v691 = vunpack.c.l.b16 %v173
    %v692 = vunpack.c.l.b16 %v174
    %v693 = vunpack.c.l.b16 %v175
    %v694 = vunpack.c.l.b16 %v176
    %v695 = vunpack.c.l.b16 %v177
    %v696 = vunpack.c.l.b16 %v178
    %v697 = vunpack.c.l.b16 %v179
    %v698 = vunpack.c.l.b16 %v180
    %v699 = vunpack.c.l.b16 %v181
    %v700 = vunpack.c.l.b16 %v182
    %v701 = vunpack.c.l.b16 %v183
    %v702 = vunpack.c.l.b16 %v184
    %v703 = vunpack.c.l.b16 %v185
    %v704 = vunpack.c.l.b16 %v186
    %v705 = vunpack.c.l.b16 %v187
    %v706 = vunpack.c.l.b16 %v188
    %v707 = vunpack.c.l.b16 %v189
    %v708 = vunpack.c.l.b16 %v190
    %v709 = vunpack.c.l.b16 %v191
    %v710 = vunpack.c.l.b16 %v192
    %v711 = vunpack.c.l.b16 %v193
    %v712 = vunpack.c.l.b16 %v194
    %v713 = vunpack.c.l.b16 %v195
    %v714 = vunpack.c.l.b16 %v196
    %v715 = vunpack.c.l.b16 %v197
    %v716 = vunpack.c.l.b16 %v198
    %v717 = vunpack.c.l.b16 %v199
    %v718 = vunpack.c.l.b16 %v200
    %v719 = vunpack.c.l.b16 %v201
    %v720 = vunpack.c.l.b16 %v202
    %v721 = vunpack.c.l.b16 %v203
    %v722 = vunpack.c.l.b16 %v204
    %v723 = vunpack.c.l.b16 %v205
    %v724 = vunpack.c.l.b16 %v206
    %v725 = vunpack.c.l.b16 %v207
    %v726 = vunpack.c.l.b16 %v208
    %v727 = vunpack.c.l.b16 %v209
    %v728 = vunpack.c.l.b16 %v210
    %v729 = vunpack.c.l.b16 %v211
    %v730 = vunpack.c.l.b16 %v212
    %v731 = vunpack.c.l.b16 %v213
    %v732 = vunpack.c.l.b16 %v214
    %v733 = vunpack.c.l.b16 %v215
    %v734 = vunpack.c.l.b16 %v216
    %v735 = vunpack.c.l.b16 %v217
    %v736 = vunpack.c.l.b16 %v218
    %v737 = vunpack.c.l.b16 %v219
    %v738 = vunpack.c.l.b16 %v220
    %v739 = vunpack.c.l.b16 %v221
    %v740 = vunpack.c.l.b16 %v222
    %v741 = vunpack.c.l.b16 %v223
    %v742 = vunpack.c.l.b16 %v224
    %v743 = vunpack.c.l.b16 %v225
    %v744 = vunpack.c.l.b16 %v226
    %v745 = vunpack.c.l.b16 %v227
    %v746 = vunpack.c.l.b16 %v228
    %v747 = vunpack.c.l.b16 %v229
    %v748 = vunpack.c.l.b16 %v230
    %v749 = vunpack.c.l.b16 %v231
    %v750 = vunpack.c.l.b16 %v232
    %v751 = vunpack.c.l.b16 %v233
    %v752 = vunpack.c.l.b16 %v234
    %v753 = vunpack.c.l.b16 %v235
    %v754 = vunpack.c.l.b16 %v236
    %v755 = vunpack.c.l.b16 %v237
    %v756 = vunpack.c.l.b16 %v238
    %v757 = vunpack.c.l.b16 %v239
    %v758 = vunpack.c.l.b16 %v240
    %v759 = vunpack.c.l.b16 %v241
    %v760 = vunpack.c.l.b16 %v242
    %v761 = vunpack.c.l.b16 %v243
    %v762 = vunpack.c.l.b16 %v244
    %v763 = vunpack.c.l.b16 %v245
    %v764 = vunpack.c.l.b16 %v246
    %v765 = vunpack.c.l.b16 %v247
    %v766 = vunpack.c.l.b16 %v248
    %v767 = vunpack.c.l.b16 %v249
    %v768 = vunpack.c.l.b16 %v250
    %v769 = vunpack.c.l.b16 %v251
    %v770 = vunpack.c.l.b16 %v252
    %v771 = vunpack.c.l.b16 %v253
    %v772 = vunpack.c.l.b16 %v254
    %v773 = vunpack.c.l.b16 %v255
    %v774 = vunpack.c.l.b16 %v256
    %v775 = vunpack.c.l.b16 %v257
    %v776 = vunpack.c.l.b16 %v258
    %v777 = vunpack.c.l.b16 %v259
    %v778 = vunpack.c.l.b16 %v260
    %v779 = vunpack.c.l.b16 %v261
    %v780 = vunpack.c.l.b16 %v262
    %v781 = vunpack.c.l.b16 %v263
    %v782 = vunpack.c.l.b16 %v264
    %v783 = vunpack.c.l.b16 %v265
    %v784 = vunpack.c.l.b16 %v266
    %v785 = vunpack.c.l.b16 %v267
    %v786 = vunpack.c.l.b16 %v268
    %v787 = vunpack.c.l.b16 %v269
    %v788 = vunpack.c.l.b16 %v270
    %v789 = vunpack.c.l.b16 %v271
    %v790 = vunpack.c.l.b16 %v272
    %v791 = vunpack.c.l.b16 %v273
    %v792 = vunpack.c.l.b16 %v274
    %v793 = vunpack.c.l.b16 %v275
    %v794 = vunpack.c.l.b16 %v276
    %v795 = vunpack.c.l.b16 %v277
    %v796 = vunpack.c.l.b16 %v278
    %v797 = vunpack.c.l.b16 %v279
    %v798 = vunpack.c.l.b16 %v280
    %v799 = vunpack.c.l.b16 %v281
    %v800 = vunpack.c.l.b16 %v282
    %v801 = vunpack.c.l.b16 %v283
    %v802 = vpack.c.b16 %v547, %v546
    %v803 = vpack.c.b16 %v549, %v548
    %v804 = vpack.c.b16 %v551, %v550
    %v805 = vpack.c.b16 %v553, %v552
    %v806 = vpack.c.b16 %v555, %v554
    %v807 = vpack.c.b16 %v557, %v556
    %v808 = vpack.c.b16 %v559, %v558
    %v809 = vpack.c.b16 %v561, %v560
    %v810 = vpack.c.b16 %v563, %v562
    %v811 = vpack.c.b16 %v565, %v564
    %v812 = vpack.c.b16 %v567, %v566
    %v813 = vpack.c.b16 %v569, %v568
    %v814 = vpack.c.b16 %v571, %v570
    %v815 = vpack.c.b16 %v573, %v572
    %v816 = vpack.c.b16 %v575, %v574
    %v817 = vpack.c.b16 %v577, %v576
    %v818 = vpack.c.b16 %v579, %v578
    %v819 = vpack.c.b16 %v581, %v580
    %v820 = vpack.c.b16 %v583, %v582
    %v821 = vpack.c.b16 %v585, %v584
    %v822 = vpack.c.b16 %v587, %v586
    %v823 = vpack.c.b16 %v589, %v588
    %v824 = vpack.c.b16 %v591, %v590
    %v825 = vpack.c.b16 %v593, %v592
    %v826 = vpack.c.b16 %v595, %v594
    %v827 = vpack.c.b16 %v597, %v596
    %v828 = vpack.c.b16 %v599, %v598
    %v829 = vpack.c.b16 %v601, %v600
    %v830 = vpack.c.b16 %v603, %v602
    %v831 = vpack.c.b16 %v605, %v604
    %v832 = vpack.c.b16 %v607, %v606
    %v833 = vpack.c.b16 %v609, %v608
    %v834 = vpack.c.b16 %v611, %v610
    %v835 = vpack.c.b16 %v613, %v612
    %v836 = vpack.c.b16 %v615, %v614
    %v837 = vpack.c.b16 %v617, %v616
    %v838 = vpack.c.b16 %v619, %v618
    %v839 = vpack.c.b16 %v621, %v620
    %v840 = vpack.c.b16 %v623, %v622
    %v841 = vpack.c.b16 %v625, %v624
    %v842 = vpack.c.b16 %v627, %v626
    %v843 = vpack.c.b16 %v629, %v628
    %v844 = vpack.c.b16 %v631, %v630
    %v845 = vpack.c.b16 %v633, %v632
    %v846 = vpack.c.b16 %v635, %v634
    %v847 = vpack.c.b16 %v637, %v636
    %v848 = vpack.c.b16 %v639, %v638
    %v849 = vpack.c.b16 %v641, %v640
    %v850 = vpack.c.b16 %v643, %v642
    %v851 = vpack.c.b16 %v645, %v644
    %v852 = vpack.c.b16 %v647, %v646
    %v853 = vpack.c.b16 %v649, %v648
    %v854 = vpack.c.b16 %v651, %v650
    %v855 = vpack.c.b16 %v653, %v652
    %v856 = vpack.c.b16 %v655, %v654
    %v857 = vpack.c.b16 %v657, %v656
    %v858 = vpack.c.b16 %v659, %v658
    %v859 = vpack.c.b16 %v661, %v660
    %v860 = vpack.c.b16 %v663, %v662
    %v861 = vpack.c.b16 %v665, %v664
    %v862 = vpack.c.b16 %v667, %v666
    %v863 = vpack.c.b16 %v669, %v668
    %v864 = vpack.c.b16 %v671, %v670
    %v865 = vpack.c.b16 %v673, %v672
    %v866 = vpack.c.b16 %v675, %v674
    %v867 = vpack.c.b16 %v677, %v676
    %v868 = vpack.c.b16 %v679, %v678
    %v869 = vpack.c.b16 %v681, %v680
    %v870 = vpack.c.b16 %v683, %v682
    %v871 = vpack.c.b16 %v685, %v684
    %v872 = vpack.c.b16 %v687, %v686
    %v873 = vpack.c.b16 %v689, %v688
    %v874 = vpack.c.b16 %v691, %v690
    %v875 = vpack.c.b16 %v693, %v692
    %v876 = vpack.c.b16 %v695, %v694
    %v877 = vpack.c.b16 %v697, %v696
    %v878 = vpack.c.b16 %v699, %v698
    %v879 = vpack.c.b16 %v701, %v700
    %v880 = vpack.c.b16 %v703, %v702
    %v881 = vpack.c.b16 %v705, %v704
    %v882 = vpack.c.b16 %v707, %v706
    %v883 = vpack.c.b16 %v709, %v708
    %v884 = vpack.c.b16 %v711, %v710
    %v885 = vpack.c.b16 %v713, %v712
    %v886 = vpack.c.b16 %v715, %v714
    %v887 = vpack.c.b16 %v717, %v716
    %v888 = vpack.c.b16 %v719, %v718
    %v889 = vpack.c.b16 %v721, %v720
    %v890 = vpack.c.b16 %v723, %v722
    %v891 = vpack.c.b16 %v725, %v724
    %v892 = vpack.c.b16 %v727, %v726
    %v893 = vpack.c.b16 %v729, %v728
    %v894 = vpack.c.b16 %v731, %v730
    %v895 = vpack.c.b16 %v733, %v732
    %v896 = vpack.c.b16 %v735, %v734
    %v897 = vpack.c.b16 %v737, %v736
    %v898 = vpack.c.b16 %v739, %v738
    %v899 = vpack.c.b16 %v741, %v740
    %v900 = vpack.c.b16 %v743, %v742
    %v901 = vpack.c.b16 %v745, %v744
    %v902 = vpack.c.b16 %v747, %v746
    %v903 = vpack.c.b16 %v749, %v748
    %v904 = vpack.c.b16 %v751, %v750
    %v905 = vpack.c.b16 %v753, %v752
    %v906 = vpack.c.b16 %v755, %v754
    %v907 = vpack.c.b16 %v757, %v756
    %v908 = vpack.c.b16 %v759, %v758
    %v909 = vpack.c.b16 %v761, %v760
    %v910 = vpack.c.b16 %v763, %v762
    %v911 = vpack.c.b16 %v765, %v764
    %v912 = vpack.c.b16 %v767, %v766
    %v913 = vpack.c.b16 %v769, %v768
    %v914 = vpack.c.b16 %v771, %v770
    %v915 = vpack.c.b16 %v773, %v772
    %v916 = vpack.c.b16 %v775, %v774
    %v917 = vpack.c.b16 %v777, %v776
    %v918 = vpack.c.b16 %v779, %v778
    %v919 = vpack.c.b16 %v781, %v780
    %v920 = vpack.c.b16 %v783, %v782
    %v921 = vpack.c.b16 %v785, %v784
    %v922 = vpack.c.b16 %v787, %v786
    %v923 = vpack.c.b16 %v789, %v788
    %v924 = vpack.c.b16 %v791, %v790
    %v925 = vpack.c.b16 %v793, %v792
    %v926 = vpack.c.b16 %v795, %v794
    %v927 = vpack.c.b16 %v797, %v796
    %v928 = vpack.c.b16 %v799, %v798
    %v929 = vpack.c.b16 %v801, %v800
    %1058 = vmatprep.subr.bf16.mxu0 0
    %1059 = vmatpush1.bf16.xpose.msra.mxu0 %v802
    %1060 = vmatprep.subr.bf16.mxu0 0
    %1061 = vmatpush1.bf16.xpose.msra.mxu0 %v803
    %1062 = vmatprep.subr.bf16.mxu0 0
    %1063 = vmatpush1.bf16.xpose.msra.mxu0 %v804
    %1064 = vmatprep.subr.bf16.mxu0 0
    %1065 = vmatpush1.bf16.xpose.msra.mxu0 %v805
    %1066 = vmatprep.subr.bf16.mxu0 0
    %1067 = vmatpush1.bf16.xpose.msra.mxu0 %v806
    %1068 = vmatprep.subr.bf16.mxu0 0
    %1069 = vmatpush1.bf16.xpose.msra.mxu0 %v807
    %1070 = vmatprep.subr.bf16.mxu0 0
    %1071 = vmatpush1.bf16.xpose.msra.mxu0 %v808
    %1072 = vmatprep.subr.bf16.mxu0 0
    %1073 = vmatpush1.bf16.xpose.msra.mxu0 %v809
    %1074 = vmatprep.subr.bf16.mxu0 0
    %1075 = vmatpush1.bf16.xpose.msra.mxu0 %v810
    %1076 = vmatprep.subr.bf16.mxu0 0
    %1077 = vmatpush1.bf16.xpose.msra.mxu0 %v811
    %1078 = vmatprep.subr.bf16.mxu0 0
    %1079 = vmatpush1.bf16.xpose.msra.mxu0 %v812
    %1080 = vmatprep.subr.bf16.mxu0 0
    %1081 = vmatpush1.bf16.xpose.msra.mxu0 %v813
    %1082 = vmatprep.subr.bf16.mxu0 0
    %1083 = vmatpush1.bf16.xpose.msra.mxu0 %v814
    %1084 = vmatprep.subr.bf16.mxu0 0
    %1085 = vmatpush1.bf16.xpose.msra.mxu0 %v815
    %1086 = vmatprep.subr.bf16.mxu0 0
    %1087 = vmatpush1.bf16.xpose.msra.mxu0 %v816
    %1088 = vmatprep.subr.bf16.mxu0 0
    %1089 = vmatpush1.bf16.xpose.msra.mxu0 %v817
    %1090 = vmatprep.mubr.bf16.mxu0 0
    %1091 = vmatmul.mubr.bf16.gmra.mrb[0].mxu0 %v288
    %v1092 = vpop.f32.mrb[0].mxu0
    %v1093 = vadd.f32 0.0, %v1092
    %v1094 = vpop.f32.mrb[0].mxu0
    %v1095 = vadd.f32 0.0, %v1094
    %v1096 = vpop.f32.mrb[0].mxu0
    %v1097 = vadd.f32 0.0, %v1096
    %v1098 = vpop.f32.mrb[0].mxu0
    %v1099 = vadd.f32 0.0, %v1098
    %1100 = vdwg.mxu0
    %1101 = vmatprep.subr.bf16.mxu0 0
    %1102 = vmatpush1.bf16.xpose.msra.mxu0 %v818
    %1103 = vmatprep.subr.bf16.mxu0 0
    %1104 = vmatpush1.bf16.xpose.msra.mxu0 %v819
    %1105 = vmatprep.subr.bf16.mxu0 0
    %1106 = vmatpush1.bf16.xpose.msra.mxu0 %v820
    %1107 = vmatprep.subr.bf16.mxu0 0
    %1108 = vmatpush1.bf16.xpose.msra.mxu0 %v821
    %1109 = vmatprep.subr.bf16.mxu0 0
    %1110 = vmatpush1.bf16.xpose.msra.mxu0 %v822
    %1111 = vmatprep.subr.bf16.mxu0 0
    %1112 = vmatpush1.bf16.xpose.msra.mxu0 %v823
    %1113 = vmatprep.subr.bf16.mxu0 0
    %1114 = vmatpush1.bf16.xpose.msra.mxu0 %v824
    %1115 = vmatprep.subr.bf16.mxu0 0
    %1116 = vmatpush1.bf16.xpose.msra.mxu0 %v825
    %1117 = vmatprep.subr.bf16.mxu0 0
    %1118 = vmatpush1.bf16.xpose.msra.mxu0 %v826
    %1119 = vmatprep.subr.bf16.mxu0 0
    %1120 = vmatpush1.bf16.xpose.msra.mxu0 %v827
    %1121 = vmatprep.subr.bf16.mxu0 0
    %1122 = vmatpush1.bf16.xpose.msra.mxu0 %v828
    %1123 = vmatprep.subr.bf16.mxu0 0
    %1124 = vmatpush1.bf16.xpose.msra.mxu0 %v829
    %1125 = vmatprep.subr.bf16.mxu0 0
    %1126 = vmatpush1.bf16.xpose.msra.mxu0 %v830
    %1127 = vmatprep.subr.bf16.mxu0 0
    %1128 = vmatpush1.bf16.xpose.msra.mxu0 %v831
    %1129 = vmatprep.subr.bf16.mxu0 0
    %1130 = vmatpush1.bf16.xpose.msra.mxu0 %v832
    %1131 = vmatprep.subr.bf16.mxu0 0
    %1132 = vmatpush1.bf16.xpose.msra.mxu0 %v833
    %1133 = vmatprep.mubr.bf16.mxu0 0
    %1134 = vmatmul.mubr.bf16.gmra.mrb[0].mxu0 %v288
    %v1135 = vpop.f32.mrb[0].mxu0
    %v1136 = vadd.f32 0.0, %v1135
    %v1137 = vpop.f32.mrb[0].mxu0
    %v1138 = vadd.f32 0.0, %v1137
    %v1139 = vpop.f32.mrb[0].mxu0
    %v1140 = vadd.f32 0.0, %v1139
    %v1141 = vpop.f32.mrb[0].mxu0
    %v1142 = vadd.f32 0.0, %v1141
    %1143 = vdwg.mxu0
    %1144 = vmatprep.subr.bf16.mxu0 0
    %1145 = vmatpush1.bf16.xpose.msra.mxu0 %v834
    %1146 = vmatprep.subr.bf16.mxu0 0
    %1147 = vmatpush1.bf16.xpose.msra.mxu0 %v835
    %1148 = vmatprep.subr.bf16.mxu0 0
    %1149 = vmatpush1.bf16.xpose.msra.mxu0 %v836
    %1150 = vmatprep.subr.bf16.mxu0 0
    %1151 = vmatpush1.bf16.xpose.msra.mxu0 %v837
    %1152 = vmatprep.subr.bf16.mxu0 0
    %1153 = vmatpush1.bf16.xpose.msra.mxu0 %v838
    %1154 = vmatprep.subr.bf16.mxu0 0
    %1155 = vmatpush1.bf16.xpose.msra.mxu0 %v839
    %1156 = vmatprep.subr.bf16.mxu0 0
    %1157 = vmatpush1.bf16.xpose.msra.mxu0 %v840
    %1158 = vmatprep.subr.bf16.mxu0 0
    %1159 = vmatpush1.bf16.xpose.msra.mxu0 %v841
    %1160 = vmatprep.subr.bf16.mxu0 0
    %1161 = vmatpush1.bf16.xpose.msra.mxu0 %v842
    %1162 = vmatprep.subr.bf16.mxu0 0
    %1163 = vmatpush1.bf16.xpose.msra.mxu0 %v843
    %1164 = vmatprep.subr.bf16.mxu0 0
    %1165 = vmatpush1.bf16.xpose.msra.mxu0 %v844
    %1166 = vmatprep.subr.bf16.mxu0 0
    %1167 = vmatpush1.bf16.xpose.msra.mxu0 %v845
    %1168 = vmatprep.subr.bf16.mxu0 0
    %1169 = vmatpush1.bf16.xpose.msra.mxu0 %v846
    %1170 = vmatprep.subr.bf16.mxu0 0
    %1171 = vmatpush1.bf16.xpose.msra.mxu0 %v847
    %1172 = vmatprep.subr.bf16.mxu0 0
    %1173 = vmatpush1.bf16.xpose.msra.mxu0 %v848
    %1174 = vmatprep.subr.bf16.mxu0 0
    %1175 = vmatpush1.bf16.xpose.msra.mxu0 %v849
    %1176 = vmatprep.mubr.bf16.mxu0 0
    %1177 = vmatmul.mubr.bf16.gmra.mrb[0].mxu0 %v288
    %v1178 = vpop.f32.mrb[0].mxu0
    %v1179 = vadd.f32 0.0, %v1178
    %v1180 = vpop.f32.mrb[0].mxu0
    %v1181 = vadd.f32 0.0, %v1180
    %v1182 = vpop.f32.mrb[0].mxu0
    %v1183 = vadd.f32 0.0, %v1182
    %v1184 = vpop.f32.mrb[0].mxu0
    %v1185 = vadd.f32 0.0, %v1184
    %1186 = vdwg.mxu0
    %1187 = vmatprep.subr.bf16.mxu0 0
    %1188 = vmatpush1.bf16.xpose.msra.mxu0 %v850
    %1189 = vmatprep.subr.bf16.mxu0 0
    %1190 = vmatpush1.bf16.xpose.msra.mxu0 %v851
    %1191 = vmatprep.subr.bf16.mxu0 0
    %1192 = vmatpush1.bf16.xpose.msra.mxu0 %v852
    %1193 = vmatprep.subr.bf16.mxu0 0
    %1194 = vmatpush1.bf16.xpose.msra.mxu0 %v853
    %1195 = vmatprep.subr.bf16.mxu0 0
    %1196 = vmatpush1.bf16.xpose.msra.mxu0 %v854
    %1197 = vmatprep.subr.bf16.mxu0 0
    %1198 = vmatpush1.bf16.xpose.msra.mxu0 %v855
    %1199 = vmatprep.subr.bf16.mxu0 0
    %1200 = vmatpush1.bf16.xpose.msra.mxu0 %v856
    %1201 = vmatprep.subr.bf16.mxu0 0
    %1202 = vmatpush1.bf16.xpose.msra.mxu0 %v857
    %1203 = vmatprep.subr.bf16.mxu0 0
    %1204 = vmatpush1.bf16.xpose.msra.mxu0 %v858
    %1205 = vmatprep.subr.bf16.mxu0 0
    %1206 = vmatpush1.bf16.xpose.msra.mxu0 %v859
    %1207 = vmatprep.subr.bf16.mxu0 0
    %1208 = vmatpush1.bf16.xpose.msra.mxu0 %v860
    %1209 = vmatprep.subr.bf16.mxu0 0
    %1210 = vmatpush1.bf16.xpose.msra.mxu0 %v861
    %1211 = vmatprep.subr.bf16.mxu0 0
    %1212 = vmatpush1.bf16.xpose.msra.mxu0 %v862
    %1213 = vmatprep.subr.bf16.mxu0 0
    %1214 = vmatpush1.bf16.xpose.msra.mxu0 %v863
    %1215 = vmatprep.subr.bf16.mxu0 0
    %1216 = vmatpush1.bf16.xpose.msra.mxu0 %v864
    %1217 = vmatprep.subr.bf16.mxu0 0
    %1218 = vmatpush1.bf16.xpose.msra.mxu0 %v865
    %1219 = vmatprep.mubr.bf16.mxu0 0
    %1220 = vmatmul.mubr.bf16.gmra.mrb[0].mxu0 %v288
    %v1221 = vpop.f32.mrb[0].mxu0
    %v1222 = vadd.f32 0.0, %v1221
    %v1223 = vpop.f32.mrb[0].mxu0
    %v1224 = vadd.f32 0.0, %v1223
    %v1225 = vpop.f32.mrb[0].mxu0
    %v1226 = vadd.f32 0.0, %v1225
    %v1227 = vpop.f32.mrb[0].mxu0
    %v1228 = vadd.f32 0.0, %v1227
    %1229 = vdwg.mxu0
    %1230 = vmatprep.subr.bf16.mxu0 0
    %1231 = vmatpush1.bf16.xpose.msra.mxu0 %v866
    %1232 = vmatprep.subr.bf16.mxu0 0
    %1233 = vmatpush1.bf16.xpose.msra.mxu0 %v867
    %1234 = vmatprep.subr.bf16.mxu0 0
    %1235 = vmatpush1.bf16.xpose.msra.mxu0 %v868
    %1236 = vmatprep.subr.bf16.mxu0 0
    %1237 = vmatpush1.bf16.xpose.msra.mxu0 %v869
    %1238 = vmatprep.subr.bf16.mxu0 0
    %1239 = vmatpush1.bf16.xpose.msra.mxu0 %v870
    %1240 = vmatprep.subr.bf16.mxu0 0
    %1241 = vmatpush1.bf16.xpose.msra.mxu0 %v871
    %1242 = vmatprep.subr.bf16.mxu0 0
    %1243 = vmatpush1.bf16.xpose.msra.mxu0 %v872
    %1244 = vmatprep.subr.bf16.mxu0 0
    %1245 = vmatpush1.bf16.xpose.msra.mxu0 %v873
    %1246 = vmatprep.subr.bf16.mxu0 0
    %1247 = vmatpush1.bf16.xpose.msra.mxu0 %v874
    %1248 = vmatprep.subr.bf16.mxu0 0
    %1249 = vmatpush1.bf16.xpose.msra.mxu0 %v875
    %1250 = vmatprep.subr.bf16.mxu0 0
    %1251 = vmatpush1.bf16.xpose.msra.mxu0 %v876
    %1252 = vmatprep.subr.bf16.mxu0 0
    %1253 = vmatpush1.bf16.xpose.msra.mxu0 %v877
    %1254 = vmatprep.subr.bf16.mxu0 0
    %1255 = vmatpush1.bf16.xpose.msra.mxu0 %v878
    %1256 = vmatprep.subr.bf16.mxu0 0
    %1257 = vmatpush1.bf16.xpose.msra.mxu0 %v879
    %1258 = vmatprep.subr.bf16.mxu0 0
    %1259 = vmatpush1.bf16.xpose.msra.mxu0 %v880
    %1260 = vmatprep.subr.bf16.mxu0 0
    %1261 = vmatpush1.bf16.xpose.msra.mxu0 %v881
    %1262 = vmatprep.mubr.bf16.mxu0 0
    %1263 = vmatmul.mubr.bf16.gmra.mrb[0].mxu0 %v288
    %v1264 = vpop.f32.mrb[0].mxu0
    %v1265 = vadd.f32 0.0, %v1264
    %v1266 = vpop.f32.mrb[0].mxu0
    %v1267 = vadd.f32 0.0, %v1266
    %v1268 = vpop.f32.mrb[0].mxu0
    %v1269 = vadd.f32 0.0, %v1268
    %v1270 = vpop.f32.mrb[0].mxu0
    %v1271 = vadd.f32 0.0, %v1270
    %1272 = vdwg.mxu0
    %1273 = vmatprep.subr.bf16.mxu0 0
    %1274 = vmatpush1.bf16.xpose.msra.mxu0 %v882
    %1275 = vmatprep.subr.bf16.mxu0 0
    %1276 = vmatpush1.bf16.xpose.msra.mxu0 %v883
    %1277 = vmatprep.subr.bf16.mxu0 0
    %1278 = vmatpush1.bf16.xpose.msra.mxu0 %v884
    %1279 = vmatprep.subr.bf16.mxu0 0
    %1280 = vmatpush1.bf16.xpose.msra.mxu0 %v885
    %1281 = vmatprep.subr.bf16.mxu0 0
    %1282 = vmatpush1.bf16.xpose.msra.mxu0 %v886
    %1283 = vmatprep.subr.bf16.mxu0 0
    %1284 = vmatpush1.bf16.xpose.msra.mxu0 %v887
    %1285 = vmatprep.subr.bf16.mxu0 0
    %1286 = vmatpush1.bf16.xpose.msra.mxu0 %v888
    %1287 = vmatprep.subr.bf16.mxu0 0
    %1288 = vmatpush1.bf16.xpose.msra.mxu0 %v889
    %1289 = vmatprep.subr.bf16.mxu0 0
    %1290 = vmatpush1.bf16.xpose.msra.mxu0 %v890
    %1291 = vmatprep.subr.bf16.mxu0 0
    %1292 = vmatpush1.bf16.xpose.msra.mxu0 %v891
    %1293 = vmatprep.subr.bf16.mxu0 0
    %1294 = vmatpush1.bf16.xpose.msra.mxu0 %v892
    %1295 = vmatprep.subr.bf16.mxu0 0
    %1296 = vmatpush1.bf16.xpose.msra.mxu0 %v893
    %1297 = vmatprep.subr.bf16.mxu0 0
    %1298 = vmatpush1.bf16.xpose.msra.mxu0 %v894
    %1299 = vmatprep.subr.bf16.mxu0 0
    %1300 = vmatpush1.bf16.xpose.msra.mxu0 %v895
    %1301 = vmatprep.subr.bf16.mxu0 0
    %1302 = vmatpush1.bf16.xpose.msra.mxu0 %v896
    %1303 = vmatprep.subr.bf16.mxu0 0
    %1304 = vmatpush1.bf16.xpose.msra.mxu0 %v897
    %1305 = vmatprep.mubr.bf16.mxu0 0
    %1306 = vmatmul.mubr.bf16.gmra.mrb[0].mxu0 %v288
    %v1307 = vpop.f32.mrb[0].mxu0
    %v1308 = vadd.f32 0.0, %v1307
    %v1309 = vpop.f32.mrb[0].mxu0
    %v1310 = vadd.f32 0.0, %v1309
    %v1311 = vpop.f32.mrb[0].mxu0
    %v1312 = vadd.f32 0.0, %v1311
    %v1313 = vpop.f32.mrb[0].mxu0
    %v1314 = vadd.f32 0.0, %v1313
    %1315 = vdwg.mxu0
    %1316 = vmatprep.subr.bf16.mxu0 0
    %1317 = vmatpush1.bf16.xpose.msra.mxu0 %v898
    %1318 = vmatprep.subr.bf16.mxu0 0
    %1319 = vmatpush1.bf16.xpose.msra.mxu0 %v899
    %1320 = vmatprep.subr.bf16.mxu0 0
    %1321 = vmatpush1.bf16.xpose.msra.mxu0 %v900
    %1322 = vmatprep.subr.bf16.mxu0 0
    %1323 = vmatpush1.bf16.xpose.msra.mxu0 %v901
    %1324 = vmatprep.subr.bf16.mxu0 0
    %1325 = vmatpush1.bf16.xpose.msra.mxu0 %v902
    %1326 = vmatprep.subr.bf16.mxu0 0
    %1327 = vmatpush1.bf16.xpose.msra.mxu0 %v903
    %1328 = vmatprep.subr.bf16.mxu0 0
    %1329 = vmatpush1.bf16.xpose.msra.mxu0 %v904
    %1330 = vmatprep.subr.bf16.mxu0 0
    %1331 = vmatpush1.bf16.xpose.msra.mxu0 %v905
    %1332 = vmatprep.subr.bf16.mxu0 0
    %1333 = vmatpush1.bf16.xpose.msra.mxu0 %v906
    %1334 = vmatprep.subr.bf16.mxu0 0
    %1335 = vmatpush1.bf16.xpose.msra.mxu0 %v907
    %1336 = vmatprep.subr.bf16.mxu0 0
    %1337 = vmatpush1.bf16.xpose.msra.mxu0 %v908
    %1338 = vmatprep.subr.bf16.mxu0 0
    %1339 = vmatpush1.bf16.xpose.msra.mxu0 %v909
    %1340 = vmatprep.subr.bf16.mxu0 0
    %1341 = vmatpush1.bf16.xpose.msra.mxu0 %v910
    %1342 = vmatprep.subr.bf16.mxu0 0
    %1343 = vmatpush1.bf16.xpose.msra.mxu0 %v911
    %1344 = vmatprep.subr.bf16.mxu0 0
    %1345 = vmatpush1.bf16.xpose.msra.mxu0 %v912
    %1346 = vmatprep.subr.bf16.mxu0 0
    %1347 = vmatpush1.bf16.xpose.msra.mxu0 %v913
    %1348 = vmatprep.mubr.bf16.mxu0 0
    %1349 = vmatmul.mubr.bf16.gmra.mrb[0].mxu0 %v288
    %v1350 = vpop.f32.mrb[0].mxu0
    %v1351 = vadd.f32 0.0, %v1350
    %v1352 = vpop.f32.mrb[0].mxu0
    %v1353 = vadd.f32 0.0, %v1352
    %v1354 = vpop.f32.mrb[0].mxu0
    %v1355 = vadd.f32 0.0, %v1354
    %v1356 = vpop.f32.mrb[0].mxu0
    %v1357 = vadd.f32 0.0, %v1356
    %1358 = vdwg.mxu0
    %1359 = vmatprep.subr.bf16.mxu0 0
    %1360 = vmatpush1.bf16.xpose.msra.mxu0 %v914
    %1361 = vmatprep.subr.bf16.mxu0 0
    %1362 = vmatpush1.bf16.xpose.msra.mxu0 %v915
    %1363 = vmatprep.subr.bf16.mxu0 0
    %1364 = vmatpush1.bf16.xpose.msra.mxu0 %v916
    %1365 = vmatprep.subr.bf16.mxu0 0
    %1366 = vmatpush1.bf16.xpose.msra.mxu0 %v917
    %1367 = vmatprep.subr.bf16.mxu0 0
    %1368 = vmatpush1.bf16.xpose.msra.mxu0 %v918
    %1369 = vmatprep.subr.bf16.mxu0 0
    %1370 = vmatpush1.bf16.xpose.msra.mxu0 %v919
    %1371 = vmatprep.subr.bf16.mxu0 0
    %1372 = vmatpush1.bf16.xpose.msra.mxu0 %v920
    %1373 = vmatprep.subr.bf16.mxu0 0
    %1374 = vmatpush1.bf16.xpose.msra.mxu0 %v921
    %1375 = vmatprep.subr.bf16.mxu0 0
    %1376 = vmatpush1.bf16.xpose.msra.mxu0 %v922
    %1377 = vmatprep.subr.bf16.mxu0 0
    %1378 = vmatpush1.bf16.xpose.msra.mxu0 %v923
    %1379 = vmatprep.subr.bf16.mxu0 0
    %1380 = vmatpush1.bf16.xpose.msra.mxu0 %v924
    %1381 = vmatprep.subr.bf16.mxu0 0
    %1382 = vmatpush1.bf16.xpose.msra.mxu0 %v925
    %1383 = vmatprep.subr.bf16.mxu0 0
    %1384 = vmatpush1.bf16.xpose.msra.mxu0 %v926
    %1385 = vmatprep.subr.bf16.mxu0 0
    %1386 = vmatpush1.bf16.xpose.msra.mxu0 %v927
    %1387 = vmatprep.subr.bf16.mxu0 0
    %1388 = vmatpush1.bf16.xpose.msra.mxu0 %v928
    %1389 = vmatprep.subr.bf16.mxu0 0
    %1390 = vmatpush1.bf16.xpose.msra.mxu0 %v929
    %1391 = vmatprep.mubr.bf16.mxu0 0
    %1392 = vmatmul.mubr.bf16.gmra.mrb[0].mxu0 %v288
    %v1393 = vpop.f32.mrb[0].mxu0
    %v1394 = vadd.f32 0.0, %v1393
    %v1395 = vpop.f32.mrb[0].mxu0
    %v1396 = vadd.f32 0.0, %v1395
    %v1397 = vpop.f32.mrb[0].mxu0
    %v1398 = vadd.f32 0.0, %v1397
    %v1399 = vpop.f32.mrb[0].mxu0
    %v1400 = vadd.f32 0.0, %v1399
    %1401 = vdwg.mxu0
    %1402 = vst [vmem:[%s2] sm:$0xff] %v1093
    %1403 = vst [vmem:[%s2 + $0x8] sm:$0xff] %v1095
    %1404 = vst [vmem:[%s2 + $0x10] sm:$0xff] %v1136
    %1405 = vst [vmem:[%s2 + $0x18] sm:$0xff] %v1138
    %1406 = vst [vmem:[%s2 + $0x20] sm:$0xff] %v1179
    %1407 = vst [vmem:[%s2 + $0x28] sm:$0xff] %v1181
    %1408 = vst [vmem:[%s2 + $0x30] sm:$0xff] %v1222
    %1409 = vst [vmem:[%s2 + $0x38] sm:$0xff] %v1224
    %1410 = vst [vmem:[%s2 + $0x40] sm:$0xff] %v1265
    %1411 = vst [vmem:[%s2 + $0x48] sm:$0xff] %v1267
    %1412 = vst [vmem:[%s2 + $0x50] sm:$0xff] %v1308
    %1413 = vst [vmem:[%s2 + $0x58] sm:$0xff] %v1310
    %1414 = vst [vmem:[%s2 + $0x60] sm:$0xff] %v1351
    %1415 = vst [vmem:[%s2 + $0x68] sm:$0xff] %v1353
    %1416 = vst [vmem:[%s2 + $0x70] sm:$0xff] %v1394
    %1417 = vst [vmem:[%s2 + $0x78] sm:$0xff] %v1396
    %1418 = vst [vmem:[%s2 + $0x80] sm:$0xff] %v1097
    %1419 = vst [vmem:[%s2 + $0x88] sm:$0xff] %v1099
    %1420 = vst [vmem:[%s2 + $0x90] sm:$0xff] %v1140
    %1421 = vst [vmem:[%s2 + $0x98] sm:$0xff] %v1142
    %1422 = vst [vmem:[%s2 + $0xa0] sm:$0xff] %v1183
    %1423 = vst [vmem:[%s2 + $0xa8] sm:$0xff] %v1185
    %1424 = vst [vmem:[%s2 + $0xb0] sm:$0xff] %v1226
    %1425 = vst [vmem:[%s2 + $0xb8] sm:$0xff] %v1228
    %1426 = vst [vmem:[%s2 + $0xc0] sm:$0xff] %v1269
    %1427 = vst [vmem:[%s2 + $0xc8] sm:$0xff] %v1271
    %1428 = vst [vmem:[%s2 + $0xd0] sm:$0xff] %v1312
    %1429 = vst [vmem:[%s2 + $0xd8] sm:$0xff] %v1314
    %1430 = vst [vmem:[%s2 + $0xe0] sm:$0xff] %v1355
    %1431 = vst [vmem:[%s2 + $0xe8] sm:$0xff] %v1357
    %1432 = vst [vmem:[%s2 + $0xf0] sm:$0xff] %v1398
    %1433 = vst [vmem:[%s2 + $0xf8] sm:$0xff] %v1400
    // Predicated region
    $region14: #{moco_forward.1} parent=1 // pred_check
      _
    $region15: #{moco_forward.1} parent=1 // pred_check_branch
      %1435 = sbr.rel (0) target = $region17
    $region16: #{moco_forward.1} parent=1 // pred_region
      _
    $region17: #{moco_forward.1} parent=1 // pred_fallthru
      _
    // Predicated region
    $region18: #{moco_forward.1} parent=1 // pred_check
      _
    $region19: #{moco_forward.1} parent=1 // pred_check_branch
      %1437 = sbr.rel (0) target = $region21
    $region20: #{moco_forward.1} parent=1 // pred_region
      _
    $region21: #{moco_forward.1} parent=1 // pred_fallthru
      _
    %1438 = vsyncpa [#allocation3], 1

</llo_original>
